<compile_context>
chip_gen: v5e
topology: v5e:2x2
jax: 0.10.0
libtpu: 0.0.40
codegen_flags: <defaults>
</compile_context>

<pallas_src>
import jax
import jax.numpy as jnp
from jax.experimental import pallas as pl
from jax.experimental.pallas import tpu as pltpu

EPS = 1e-5


def _make_kernel(num_channels, batch, eps):
    inv_n = 1.0 / float(batch)

    def kernel(*refs):
        x_refs = refs[:num_channels]
        gamma_ref = refs[num_channels]
        beta_ref = refs[num_channels + 1]
        out_refs = refs[num_channels + 2:]

        # Unrolled over channels (C is a small compile-time constant).
        for c in range(num_channels):
            x_ref = x_refs[c]
            # Pass 1 (VMEM only): batch mean, accumulated in f32.
            mean = jnp.sum(x_ref[...].astype(jnp.float32), axis=0, keepdims=True) * inv_n
            # Pass 2 (VMEM only): biased variance in the two-pass (x-mean)^2
            # form -- no E[x^2]-mean^2 cancellation; `centered` dies here.
            centered = x_ref[...].astype(jnp.float32) - mean
            var = jnp.sum(centered * centered, axis=0, keepdims=True) * inv_n
            # Fused normalize + affine: y = x*scale + shift.
            scale = jax.lax.rsqrt(var + eps) * gamma_ref[c:c + 1, :].astype(jnp.float32)
            shift = beta_ref[c:c + 1, :].astype(jnp.float32) - mean * scale
            # Re-read the VMEM tile for the output pass (no live f32 copy of x).
            out_refs[c][...] = (x_ref[...].astype(jnp.float32) * scale + shift
                                ).astype(out_refs[c].dtype)

    return kernel


def _vmem_capacity_bytes():
    try:
        cap = getattr(pltpu.get_tpu_info(), "vmem_capacity_bytes", None)
        if cap:
            return int(cap)
    except Exception:
        pass
    return 64 << 20  # conservative fallback: v7x per-TensorCore VMEM


def _pick_tile_d(D, N, C, elt, step_budget_bytes):
    """Largest feature-tile width (multiple of 128 dividing D, capped at 1024
    lanes) whose double-buffered per-step footprint fits `step_budget_bytes`."""
    if D % 128 != 0:
        # Lane dim must be a multiple of 128 or the full array dim: take it whole.
        return D
    per_lane = 2 * 2 * C * N * elt  # 2 buffers x (in + out) x C channels
    max_t = max(128, (step_budget_bytes // max(per_lane, 1)) // 128 * 128)
    t = min(D, 1024, max_t)
    t = max(128, (t // 128) * 128)
    while D % t:
        t -= 128
    return t


def complex_batch_norm1d(channel_inputs, gamma, beta, eps=EPS, tile_d=None):
    """channel_inputs: tuple/list of C arrays, each (N, D).
    gamma, beta: (C, D) affine parameters (one row per BatchNorm1d layer).
    Returns a tuple of C normalized arrays, each (N, D)."""
    channel_inputs = tuple(channel_inputs)
    C = len(channel_inputs)
    N, D = channel_inputs[0].shape
    if N < 2:
        # nn.BatchNorm1d raises in training mode for batch size 1.
        raise ValueError(
            f"Expected more than 1 value per channel in training mode, got batch={N}")
    gamma = jnp.asarray(gamma, jnp.float32).reshape(C, D)
    beta = jnp.asarray(beta, jnp.float32).reshape(C, D)

    elt = jnp.dtype(channel_inputs[0].dtype).itemsize
    vmem_cap = _vmem_capacity_bytes()
    usable = int(0.7 * vmem_cap)  # headroom for compiler scratch / semaphores

    if tile_d is None:
        tile_d = _pick_tile_d(D, N, C, elt, usable // 2)
    elif tile_d != D and (tile_d % 128 or D % tile_d):
        raise ValueError("tile_d must equal D or be a multiple of 128 dividing D")
    n_tiles = D // tile_d

    # Actual per-grid-step resident bytes (double-buffered in/out blocks + params).
    need = 2 * (2 * C * N * tile_d * elt + 2 * C * tile_d * 4)

    cp_kwargs = dict(dimension_semantics=("parallel",))
    if need > (16 << 20):  # smallest default scoped limit across generations
        cp_kwargs["vmem_limit_bytes"] = min(int(need * 1.5), usable)
    compiler_params = pltpu.CompilerParams(**cp_kwargs)

    x_spec = pl.BlockSpec((N, tile_d), lambda j: (0, j))
    param_spec = pl.BlockSpec((C, tile_d), lambda j: (0, j))

    out = pl.pallas_call(
        _make_kernel(C, N, eps),
        out_shape=[jax.ShapeDtypeStruct((N, D), xc.dtype) for xc in channel_inputs],
        grid=(n_tiles,),
        in_specs=[x_spec] * C + [param_spec, param_spec],
        out_specs=[x_spec] * C,
        compiler_params=compiler_params,
    )(*channel_inputs, gamma, beta)

    return tuple(out)


def _reference(channel_inputs, gamma, beta, eps=EPS):
    outs = []
    for i, xc in enumerate(channel_inputs):
        xc = xc.astype(jnp.float32)
        mean = jnp.mean(xc, axis=0, keepdims=True)
        var = jnp.mean((xc - mean) ** 2, axis=0, keepdims=True)
        y = (xc - mean) / jnp.sqrt(var + eps) * gamma[i] + beta[i]
        outs.append(y)
    return tuple(outs)


def _run_case(key, batch, num_channels, embedding_dim, tile_d=None, tol=1e-4):
    k_x, k_s, k_g, k_b = jax.random.split(key, 4)

    x_all = jax.random.normal(k_x, (num_channels, batch, embedding_dim), dtype=jnp.float32)
    # Non-zero per-feature mean so the two-pass variance path is genuinely exercised.
    x_all = x_all + 3.0 * jax.random.normal(k_s, (1, 1, embedding_dim), dtype=jnp.float32)
    channel_inputs = tuple(x_all[i] for i in range(num_channels))

    gamma = 1.0 + 0.1 * jax.random.normal(k_g, (num_channels, embedding_dim), dtype=jnp.float32)
    beta = 0.1 * jax.random.normal(k_b, (num_channels, embedding_dim), dtype=jnp.float32)

    out = complex_batch_norm1d(channel_inputs, gamma, beta, tile_d=tile_d)
    out = jax.tree_util.tree_map(jax.block_until_ready, out)

    ref = _reference(channel_inputs, gamma, beta)
    for o, r in zip(out, ref):
        assert o.shape == r.shape
        assert jnp.max(jnp.abs(o.astype(jnp.float32) - r)) < tol


if __name__ == "__main__":
    key = jax.random.PRNGKey(0)
    k1, k2 = jax.random.split(key)

    # Module-default small case: embedding_dim=32, num_channels=2, batch=8.
    _run_case(k1, batch=8, num_channels=2, embedding_dim=32)

    # Multi-tile pipelined case: D=256 split into two lane-dense 128-wide tiles.
    _run_case(k2, batch=16, num_channels=2, embedding_dim=256, tile_d=128)

    print("KERNEL_OK")
</pallas_src>

<mosaic_0001>
module attributes {stable_mosaic.version = 11 : i64} {
  func.func @kernel(%arg0: i32, %arg1: memref<8x32xf32, #tpu.memory_space<vmem>>, %arg2: memref<8x32xf32, #tpu.memory_space<vmem>>, %arg3: memref<2x32xf32, #tpu.memory_space<vmem>>, %arg4: memref<2x32xf32, #tpu.memory_space<vmem>>, %arg5: memref<8x32xf32, #tpu.memory_space<vmem>>, %arg6: memref<8x32xf32, #tpu.memory_space<vmem>>) attributes {dimension_semantics = [#tpu.dimension_semantics<parallel>], iteration_bounds = array<i64: 1>, scalar_prefetch = 0 : i64, scratch_operands = 0 : i64, tpu.core_type = #tpu.core_type<tc>, window_params = [{transform_indices = @transform_0, window_bounds = array<i64: 8, 32>}, {transform_indices = @transform_1, window_bounds = array<i64: 8, 32>}, {transform_indices = @transform_2, window_bounds = array<i64: 2, 32>}, {transform_indices = @transform_3, window_bounds = array<i64: 2, 32>}, {transform_indices = @transform_4, window_bounds = array<i64: 8, 32>}, {transform_indices = @transform_5, window_bounds = array<i64: 8, 32>}]} {
    %c0 = arith.constant 0 : index
    %c0_0 = arith.constant 0 : index
    %0 = vector.load %arg1[%c0, %c0_0] : memref<8x32xf32, #tpu.memory_space<vmem>>, vector<8x32xf32>
    %cst = arith.constant dense<0.000000e+00> : vector<32xf32>
    %1 = vector.multi_reduction <add>, %0, %cst [0] : vector<8x32xf32> to vector<32xf32>
    %2 = vector.shape_cast %1 : vector<32xf32> to vector<1x32xf32>
    %cst_1 = arith.constant 1.250000e-01 : f32
    %3 = vector.broadcast %cst_1 : f32 to vector<1x32xf32>
    %4 = arith.mulf %2, %3 : vector<1x32xf32>
    %c0_2 = arith.constant 0 : index
    %c0_3 = arith.constant 0 : index
    %5 = vector.load %arg1[%c0_2, %c0_3] : memref<8x32xf32, #tpu.memory_space<vmem>>, vector<8x32xf32>
    %6 = vector.broadcast %4 : vector<1x32xf32> to vector<8x32xf32>
    %7 = arith.subf %5, %6 : vector<8x32xf32>
    %8 = arith.mulf %7, %7 : vector<8x32xf32>
    %cst_4 = arith.constant dense<0.000000e+00> : vector<32xf32>
    %9 = vector.multi_reduction <add>, %8, %cst_4 [0] : vector<8x32xf32> to vector<32xf32>
    %10 = vector.shape_cast %9 : vector<32xf32> to vector<1x32xf32>
    %cst_5 = arith.constant 1.250000e-01 : f32
    %11 = vector.broadcast %cst_5 : f32 to vector<1x32xf32>
    %12 = arith.mulf %10, %11 : vector<1x32xf32>
    %cst_6 = arith.constant 9.99999974E-6 : f32
    %13 = vector.broadcast %cst_6 : f32 to vector<1x32xf32>
    %14 = arith.addf %12, %13 : vector<1x32xf32>
    %15 = math.rsqrt %14 : vector<1x32xf32>
    %c0_7 = arith.constant 0 : index
    %c0_8 = arith.constant 0 : index
    %16 = vector.load %arg3[%c0_7, %c0_8] : memref<2x32xf32, #tpu.memory_space<vmem>>, vector<1x32xf32>
    %17 = arith.mulf %15, %16 : vector<1x32xf32>
    %c0_9 = arith.constant 0 : index
    %c0_10 = arith.constant 0 : index
    %18 = vector.load %arg4[%c0_9, %c0_10] : memref<2x32xf32, #tpu.memory_space<vmem>>, vector<1x32xf32>
    %19 = arith.mulf %4, %17 : vector<1x32xf32>
    %20 = arith.subf %18, %19 : vector<1x32xf32>
    %c0_11 = arith.constant 0 : index
    %c0_12 = arith.constant 0 : index
    %21 = vector.load %arg1[%c0_11, %c0_12] : memref<8x32xf32, #tpu.memory_space<vmem>>, vector<8x32xf32>
    %22 = vector.broadcast %17 : vector<1x32xf32> to vector<8x32xf32>
    %23 = arith.mulf %21, %22 : vector<8x32xf32>
    %24 = vector.broadcast %20 : vector<1x32xf32> to vector<8x32xf32>
    %25 = arith.addf %23, %24 : vector<8x32xf32>
    %c0_13 = arith.constant 0 : index
    %c0_14 = arith.constant 0 : index
    %26 = vector.load %arg5[%c0_13, %c0_14] : memref<8x32xf32, #tpu.memory_space<vmem>>, vector<8x32xf32>
    tpu.vector_store %arg5[%c0_13, %c0_14], %25 {strides = array<i32>} : memref<8x32xf32, #tpu.memory_space<vmem>>, vector<8x32xf32>,
    %c0_15 = arith.constant 0 : index
    %c0_16 = arith.constant 0 : index
    %27 = vector.load %arg2[%c0_15, %c0_16] : memref<8x32xf32, #tpu.memory_space<vmem>>, vector<8x32xf32>
    %cst_17 = arith.constant dense<0.000000e+00> : vector<32xf32>
    %28 = vector.multi_reduction <add>, %27, %cst_17 [0] : vector<8x32xf32> to vector<32xf32>
    %29 = vector.shape_cast %28 : vector<32xf32> to vector<1x32xf32>
    %cst_18 = arith.constant 1.250000e-01 : f32
    %30 = vector.broadcast %cst_18 : f32 to vector<1x32xf32>
    %31 = arith.mulf %29, %30 : vector<1x32xf32>
    %c0_19 = arith.constant 0 : index
    %c0_20 = arith.constant 0 : index
    %32 = vector.load %arg2[%c0_19, %c0_20] : memref<8x32xf32, #tpu.memory_space<vmem>>, vector<8x32xf32>
    %33 = vector.broadcast %31 : vector<1x32xf32> to vector<8x32xf32>
    %34 = arith.subf %32, %33 : vector<8x32xf32>
    %35 = arith.mulf %34, %34 : vector<8x32xf32>
    %cst_21 = arith.constant dense<0.000000e+00> : vector<32xf32>
    %36 = vector.multi_reduction <add>, %35, %cst_21 [0] : vector<8x32xf32> to vector<32xf32>
    %37 = vector.shape_cast %36 : vector<32xf32> to vector<1x32xf32>
    %cst_22 = arith.constant 1.250000e-01 : f32
    %38 = vector.broadcast %cst_22 : f32 to vector<1x32xf32>
    %39 = arith.mulf %37, %38 : vector<1x32xf32>
    %cst_23 = arith.constant 9.99999974E-6 : f32
    %40 = vector.broadcast %cst_23 : f32 to vector<1x32xf32>
    %41 = arith.addf %39, %40 : vector<1x32xf32>
    %42 = math.rsqrt %41 : vector<1x32xf32>
    %c1 = arith.constant 1 : index
    %c0_24 = arith.constant 0 : index
    %43 = vector.load %arg3[%c1, %c0_24] : memref<2x32xf32, #tpu.memory_space<vmem>>, vector<1x32xf32>
    %44 = arith.mulf %42, %43 : vector<1x32xf32>
    %c1_25 = arith.constant 1 : index
    %c0_26 = arith.constant 0 : index
    %45 = vector.load %arg4[%c1_25, %c0_26] : memref<2x32xf32, #tpu.memory_space<vmem>>, vector<1x32xf32>
    %46 = arith.mulf %31, %44 : vector<1x32xf32>
    %47 = arith.subf %45, %46 : vector<1x32xf32>
    %c0_27 = arith.constant 0 : index
    %c0_28 = arith.constant 0 : index
    %48 = vector.load %arg2[%c0_27, %c0_28] : memref<8x32xf32, #tpu.memory_space<vmem>>, vector<8x32xf32>
    %49 = vector.broadcast %44 : vector<1x32xf32> to vector<8x32xf32>
    %50 = arith.mulf %48, %49 : vector<8x32xf32>
    %51 = vector.broadcast %47 : vector<1x32xf32> to vector<8x32xf32>
    %52 = arith.addf %50, %51 : vector<8x32xf32>
    %c0_29 = arith.constant 0 : index
    %c0_30 = arith.constant 0 : index
    %53 = vector.load %arg6[%c0_29, %c0_30] : memref<8x32xf32, #tpu.memory_space<vmem>>, vector<8x32xf32>
    tpu.vector_store %arg6[%c0_29, %c0_30], %52 {strides = array<i32>} : memref<8x32xf32, #tpu.memory_space<vmem>>, vector<8x32xf32>,
    return
  }
  func.func @transform_0(%arg0: i32) -> (i32, i32) {
    %c0_i32 = arith.constant 0 : i32
    %c0_i32_0 = arith.constant 0 : i32
    return %c0_i32, %arg0 : i32, i32
  }
  func.func @transform_1(%arg0: i32) -> (i32, i32) {
    %c0_i32 = arith.constant 0 : i32
    %c0_i32_0 = arith.constant 0 : i32
    return %c0_i32, %arg0 : i32, i32
  }
  func.func @transform_2(%arg0: i32) -> (i32, i32) {
    %c0_i32 = arith.constant 0 : i32
    %c0_i32_0 = arith.constant 0 : i32
    return %c0_i32, %arg0 : i32, i32
  }
  func.func @transform_3(%arg0: i32) -> (i32, i32) {
    %c0_i32 = arith.constant 0 : i32
    %c0_i32_0 = arith.constant 0 : i32
    return %c0_i32, %arg0 : i32, i32
  }
  func.func @transform_4(%arg0: i32) -> (i32, i32) {
    %c0_i32 = arith.constant 0 : i32
    %c0_i32_0 = arith.constant 0 : i32
    return %c0_i32, %arg0 : i32, i32
  }
  func.func @transform_5(%arg0: i32) -> (i32, i32) {
    %c0_i32 = arith.constant 0 : i32
    %c0_i32_0 = arith.constant 0 : i32
    return %c0_i32, %arg0 : i32, i32
  }
}

</mosaic_0001>

<llo_original>
// kernel: tpu_custom_call.1
$region0: #{tpu_custom_call.1}
  #allocation0 [shape = 'u32[]', space=smem, size = 0x4, offset = 0x4, fixed_abs, tag = 'smem constant byte address 0x4 - core index']
  #allocation1 [shape = 'u32[72,128]{1,0:T(1,128)}', space=vmem, size = 0x9000, scoped, tag = 'internal scratch']
  %s0 = inlined_call_operand.hbm [shape: f32[8,32], index: 0, kind: input, shape index: {}]
  %s1 = inlined_call_operand.hbm [shape: f32[8,32], index: 1, kind: input, shape index: {}]
  %s2 = inlined_call_operand.hbm [shape: f32[2,32], index: 2, kind: input, shape index: {}]
  %s3 = inlined_call_operand.vmem [shape: f32[2,32], index: 3, kind: input, shape index: {}]
  %s4 = inlined_call_operand.hbm [shape: f32[8,32], index: 4, kind: output, shape index: {0}]
  %s5 = inlined_call_operand.hbm [shape: f32[8,32], index: 5, kind: output, shape index: {1}]
  %6 = xla_tuple %s4, %s5
  %s7 = sld [smem:[#allocation0]]
  $region46: #{tpu_custom_call.1} parent=0
    _
  %s9 = ssub.s32 1, %s7
  %s10 = scalar_select 0, %s9, %s7
  $region1: #{tpu_custom_call.1} parent=0
    #allocation2 [shape = 'u8[4096]{0}', space=vmem, size = 0x1000, scoped, tag = 'input window, operand 0, single buffered']
    #allocation3 [shape = 's32[1]{0}', space=sflag, size = 0x4, scoped, tag = 'scoped memory for tpu_custom_call.1']
    #allocation4 [shape = 's32[1]{0}', space=sflag, size = 0x4, scoped, tag = 'scoped memory for tpu_custom_call.1']
    #allocation5 [shape = 'u8[4096]{0}', space=vmem, size = 0x1000, scoped, tag = 'input window, operand 1, single buffered']
    #allocation6 [shape = 's32[1]{0}', space=sflag, size = 0x4, scoped, tag = 'scoped memory for tpu_custom_call.1']
    #allocation7 [shape = 'u8[1024]{0}', space=vmem, size = 0x400, scoped, tag = 'input window, operand 2, single buffered']
    #allocation8 [shape = 'u8[4096]{0}', space=vmem, size = 0x1000, scoped, tag = 'output window, operand 0, single buffered']
    #allocation9 [shape = 'u8[4096]{0}', space=vmem, size = 0x1000, scoped, tag = 'output window, operand 1, single buffered']
    #allocation10 [shape = 's32[1]{0}', space=sflag, size = 0x4, scoped, tag = 'scoped memory for tpu_custom_call.1']
    %11 = vsyncpa [#allocation3], 0
    %12 = vsyncpa [#allocation6], 0
    %13 = vsyncpa [#allocation4], 0
    %14 = vsyncpa [#allocation10], 0
    // Predicated region
    $region2: #{tpu_custom_call.1} parent=1 // pred_check
      _
    $region3: #{tpu_custom_call.1} parent=1 // pred_check_branch
      %16 = sbr.rel (0) target = $region5
    $region4: #{tpu_custom_call.1} parent=1 // pred_region
      %18 = vsyncadd [#allocation3], 0
      %s20 = sshll.u32 %s0, 4
      %s21 = int_to_ptr.hbm [resolvable:$true] %s20
      %s22 = sshll.u32 [#allocation2], 4
      %s23 = int_to_ptr.vmem [resolvable:$true] %s22
      %25 = dma.hbm_to_vmem [thread:$0]  %s21, 128, %s23, [#allocation3]
    $region5: #{tpu_custom_call.1} parent=1 // pred_fallthru
      _
    // Predicated region
    $region6: #{tpu_custom_call.1} parent=1 // pred_check
      _
    $region7: #{tpu_custom_call.1} parent=1 // pred_check_branch
      %27 = sbr.rel (0) target = $region9
    $region8: #{tpu_custom_call.1} parent=1 // pred_region
      %29 = vsyncadd [#allocation6], 0
      %s31 = sshll.u32 %s1, 4
      %s32 = int_to_ptr.hbm [resolvable:$true] %s31
      %s33 = sshll.u32 [#allocation5], 4
      %s34 = int_to_ptr.vmem [resolvable:$true] %s33
      %36 = dma.hbm_to_vmem [thread:$0]  %s32, 128, %s34, [#allocation6]
    $region9: #{tpu_custom_call.1} parent=1 // pred_fallthru
      _
    // Predicated region
    $region10: #{tpu_custom_call.1} parent=1 // pred_check
      _
    $region11: #{tpu_custom_call.1} parent=1 // pred_check_branch
      %38 = sbr.rel (0) target = $region13
    $region12: #{tpu_custom_call.1} parent=1 // pred_region
      %40 = vsyncadd [#allocation6], 0
      %s42 = sshll.u32 %s2, 4
      %s43 = int_to_ptr.hbm [resolvable:$true] %s42
      %s44 = sshll.u32 [#allocation7], 4
      %s45 = int_to_ptr.vmem [resolvable:$true] %s44
      %47 = dma.hbm_to_vmem [thread:$0]  %s43, 32, %s45, [#allocation6]
    $region13: #{tpu_custom_call.1} parent=1 // pred_fallthru
      _
    // Predicated region
    $region14: #{tpu_custom_call.1} parent=1 // pred_check
      _
    $region15: #{tpu_custom_call.1} parent=1 // pred_check_branch
      %49 = sbr.rel (0) target = $region17
    $region16: #{tpu_custom_call.1} parent=1 // pred_region
      _
    $region17: #{tpu_custom_call.1} parent=1 // pred_fallthru
      _
    // Predicated region
    $region18: #{tpu_custom_call.1} parent=1 // pred_check
      _
    $region19: #{tpu_custom_call.1} parent=1 // pred_check_branch
      %51 = sbr.rel (0) target = $region21
    $region20: #{tpu_custom_call.1} parent=1 // pred_region
      %53 = dma.done [#allocation3], 128
    $region21: #{tpu_custom_call.1} parent=1 // pred_fallthru
      _
    // Predicated region
    $region22: #{tpu_custom_call.1} parent=1 // pred_check
      _
    $region23: #{tpu_custom_call.1} parent=1 // pred_check_branch
      %55 = sbr.rel (0) target = $region25
    $region24: #{tpu_custom_call.1} parent=1 // pred_region
      %57 = dma.done [#allocation6], 128
    $region25: #{tpu_custom_call.1} parent=1 // pred_fallthru
      _
    // Predicated region
    $region26: #{tpu_custom_call.1} parent=1 // pred_check
      _
    $region27: #{tpu_custom_call.1} parent=1 // pred_check_branch
      %59 = sbr.rel (0) target = $region29
    $region28: #{tpu_custom_call.1} parent=1 // pred_region
      %61 = dma.done [#allocation6], 32
    $region29: #{tpu_custom_call.1} parent=1 // pred_fallthru
      _
    %v62 = vld [vmem:[#allocation2] sm:$0xff]
    %vm63 = vcmask 261120
    %v64 = vsel %vm63, %v62, 0.0
    %v65 = vrot.slane %v64, 4
    %v66 = vadd.f32 %v64, %v65
    %v67 = vrot.slane %v66, 2
    %v68 = vadd.f32 %v66, %v67
    %v69 = vrot.slane %v68, 1
    %v70 = vadd.f32 %v68, %v69
    %v71 = vmul.f32 %v70, 0.125
    %v72 = vsub.f32 %v62, %v71
    %v73 = vmul.f32 %v72, %v72
    %v74 = vsel %vm63, %v73, 0.0
    %v75 = vrot.slane %v74, 4
    %v76 = vadd.f32 %v74, %v75
    %v77 = vrot.slane %v76, 2
    %v78 = vadd.f32 %v76, %v77
    %v79 = vrot.slane %v78, 1
    %v80 = vadd.f32 %v78, %v79
    %v81 = vmul.f32 %v80, 0.125
    %v82 = vadd.f32 %v81, 1e-05
    %v83 = vrsqrt.pop %v82
    %v84 = vmul.f32 %v83, %v82
    %v85 = vmul.f32 %v84, %v83
    %v86 = vmul.f32 0.5, %v85
    %v87 = vsub.f32 1.5, %v86
    %v88 = vmul.f32 %v83, %v87
    %vm89 = vweird.f32 %v82
    %vm90 = vweird.f32 %v83
    %vm91 = vmor %vm89, %vm90
    %v92 = vsel %vm91, %v83, %v88
    %v93 = vld [vmem:[#allocation7] sm:$0x1]
    %v94 = vmul.f32 %v92, %v93
    %v95 = vld [vmem:[%s3] sm:$0x1]
    %v96 = vmul.f32 %v71, %v94
    %v97 = vsub.f32 %v95, %v96
    %v98 = vperm.slane %v94, 0
    %v99 = vmul.f32 %v62, %v98
    %v100 = vperm.slane %v97, 0
    %v101 = vadd.f32 %v99, %v100
    %102 = vst.msk [vmem:[#allocation8] sm:$0xff] %vm63, %v101
    %v103 = vld [vmem:[#allocation5] sm:$0xff]
    %v104 = vsel %vm63, %v103, 0.0
    %v105 = vrot.slane %v104, 4
    %v106 = vadd.f32 %v104, %v105
    %v107 = vrot.slane %v106, 2
    %v108 = vadd.f32 %v106, %v107
    %v109 = vrot.slane %v108, 1
    %v110 = vadd.f32 %v108, %v109
    %v111 = vmul.f32 %v110, 0.125
    %v112 = vsub.f32 %v103, %v111
    %v113 = vmul.f32 %v112, %v112
    %v114 = vsel %vm63, %v113, 0.0
    %v115 = vrot.slane %v114, 4
    %v116 = vadd.f32 %v114, %v115
    %v117 = vrot.slane %v116, 2
    %v118 = vadd.f32 %v116, %v117
    %v119 = vrot.slane %v118, 1
    %v120 = vadd.f32 %v118, %v119
    %v121 = vmul.f32 %v120, 0.125
    %v122 = vadd.f32 %v121, 1e-05
    %v123 = vrsqrt.pop %v122
    %v124 = vmul.f32 %v123, %v122
    %v125 = vmul.f32 %v124, %v123
    %v126 = vmul.f32 0.5, %v125
    %v127 = vsub.f32 1.5, %v126
    %v128 = vmul.f32 %v123, %v127
    %vm129 = vweird.f32 %v122
    %vm130 = vweird.f32 %v123
    %vm131 = vmor %vm129, %vm130
    %v132 = vsel %vm131, %v123, %v128
    %v133 = vld [vmem:[#allocation7 + $0x1] sm:$0x1]
    %v134 = vmul.f32 %v132, %v133
    %v135 = vld [vmem:[%s3 + $0x1] sm:$0x1]
    %v136 = vmul.f32 %v111, %v134
    %v137 = vsub.f32 %v135, %v136
    %v138 = vperm.slane %v134, 0
    %v139 = vmul.f32 %v103, %v138
    %v140 = vperm.slane %v137, 0
    %v141 = vadd.f32 %v139, %v140
    %142 = vst.msk [vmem:[#allocation9] sm:$0xff] %vm63, %v141
    // Predicated region
    $region30: #{tpu_custom_call.1} parent=1 // pred_check
      _
    $region31: #{tpu_custom_call.1} parent=1 // pred_check_branch
      %144 = sbr.rel (0) target = $region33
    $region32: #{tpu_custom_call.1} parent=1 // pred_region
      %146 = vsyncadd [#allocation4], 0
      %s148 = sshll.u32 [#allocation8], 4
      %s149 = int_to_ptr.vmem [resolvable:$true] %s148
      %s150 = sshll.u32 %s4, 4
      %s151 = int_to_ptr.hbm [resolvable:$true] %s150
      %153 = dma.vmem_to_hbm [thread:$0]  %s149, 128, %s151, [#allocation4]
    $region33: #{tpu_custom_call.1} parent=1 // pred_fallthru
      _
    // Predicated region
    $region34: #{tpu_custom_call.1} parent=1 // pred_check
      _
    $region35: #{tpu_custom_call.1} parent=1 // pred_check_branch
      %155 = sbr.rel (0) target = $region37
    $region36: #{tpu_custom_call.1} parent=1 // pred_region
      %157 = vsyncadd [#allocation10], 0
      %s159 = sshll.u32 [#allocation9], 4
      %s160 = int_to_ptr.vmem [resolvable:$true] %s159
      %s161 = sshll.u32 %s5, 4
      %s162 = int_to_ptr.hbm [resolvable:$true] %s161
      %164 = dma.vmem_to_hbm [thread:$0]  %s160, 128, %s162, [#allocation10]
    $region37: #{tpu_custom_call.1} parent=1 // pred_fallthru
      _
    // Predicated region
    $region38: #{tpu_custom_call.1} parent=1 // pred_check
      _
    $region39: #{tpu_custom_call.1} parent=1 // pred_check_branch
      %166 = sbr.rel (0) target = $region41
    $region40: #{tpu_custom_call.1} parent=1 // pred_region
      %168 = dma.done [#allocation4], 128
    $region41: #{tpu_custom_call.1} parent=1 // pred_fallthru
      _
    // Predicated region
    $region42: #{tpu_custom_call.1} parent=1 // pred_check
      _
    $region43: #{tpu_custom_call.1} parent=1 // pred_check_branch
      %170 = sbr.rel (0) target = $region45
    $region44: #{tpu_custom_call.1} parent=1 // pred_region
      %172 = dma.done [#allocation10], 128
    $region45: #{tpu_custom_call.1} parent=1 // pred_fallthru
      _
    %173 = vsyncpa [#allocation3], 1
    %174 = vsyncpa [#allocation6], 1
    %175 = vsyncpa [#allocation4], 1
    %176 = vsyncpa [#allocation10], 1

</llo_original>
